<compile_context>
chip_gen: v7x
topology: tpu7x:2x2x1
jax: 0.10.0
libtpu: 0.0.40
codegen_flags: <defaults>
</compile_context>

<pallas_src>
import numpy as np
import jax
import jax.numpy as jnp
from jax import lax
from jax.experimental import pallas as pl
from jax.experimental.pallas import tpu as pltpu

LANE = 128


# -----------------------------------------------------------------------------
# Fused Pallas kernel: per batch tile, (nearest x2 + 3x3 valid conv + bias + GLU)
# as ONE MXU matmul against the precomputed folded matrix, all VMEM-resident.
# -----------------------------------------------------------------------------
def _fused_glu_upconv_kernel(x_ref, w_ref, b_ref, o_ref):
    # x_ref: (B_TILE, H, W*IC)   bf16   activations
    # w_ref: (2*W*IC, 2*NCp)     bf16   folded weights, columns = [value | gate]
    # b_ref: (1, 2*NCp)          f32    [value bias | gate bias]
    # o_ref: (B_TILE, H-1, NCp)  f32/bf16
    x = x_ref[...]
    # K-dim = [row-offset a=0 block | a=1 block]; the shifted view is built ONCE.
    xa = jnp.concatenate([x[:, :-1, :], x[:, 1:, :]], axis=-1)   # (B, H-1, 2*W*IC)
    bt, hm1, k = xa.shape
    xa = xa.reshape(bt * hm1, k)
    # Single-pass bf16 x bf16 MXU matmul, f32 accumulation; value+gate fused in N.
    y = jnp.dot(xa, w_ref[...], preferred_element_type=jnp.float32) + b_ref[...]
    ncp = y.shape[-1] // 2
    out = y[:, :ncp] * jax.nn.sigmoid(y[:, ncp:])                # GLU (EUP sigmoid)
    o_ref[...] = out.reshape(bt, hm1, ncp).astype(o_ref.dtype)


# -----------------------------------------------------------------------------
# Parameter preprocessing (tiny, pure JAX): fold upsample + conv taps into a
# single block-Toeplitz matrix [value | gate], lane-padded to a multiple of 128.
# -----------------------------------------------------------------------------
def _build_fused_matrix(w_sn, bias, W):
    OC2, IC, KH, KW = w_sn.shape
    OC = OC2 // 2
    Wo = 2 * W - 2
    NC = 2 * Wo * OC
    NCp = ((NC + LANE - 1) // LANE) * LANE           # pad columns -> unmasked vst
    pad = NCp - NC
    # R[r, a, di] = 1 iff kernel row di reads source row p + a for output parity r.
    R = jnp.asarray([[[1., 1., 0.], [0., 0., 1.]],
                     [[1., 0., 0.], [0., 1., 1.]]], jnp.float32)          # (2, 2, 3)
    # C[o, dj, j] = 1 iff upsampled column (o + dj) reads source column j.
    o_idx = np.arange(Wo)[:, None]
    dj = np.arange(KW)[None, :]
    src = (o_idx + dj) // 2                                               # (Wo, 3)
    C = jnp.asarray((src[:, :, None] == np.arange(W)[None, None, :]).astype(np.float32))
    # K6[r, a, j, o, c, m] = sum_{di,dj} R[r,a,di] * C[o,dj,j] * w_sn[m,c,di,dj]
    K6 = jnp.einsum('rad,oej,mcde->rajocm', R, C, w_sn)
    K6 = jnp.transpose(K6, (1, 2, 4, 0, 3, 5))        # (a, j, c, r, o, m)
    gv = K6[..., :OC].reshape(2 * W * IC, NC)          # GLU "value" half
    gg = K6[..., OC:].reshape(2 * W * IC, NC)          # GLU "gate"  half
    gv = jnp.pad(gv, ((0, 0), (0, pad)))
    gg = jnp.pad(gg, ((0, 0), (0, pad)))
    w_packed = jnp.concatenate([gv, gg], axis=1).astype(jnp.bfloat16)   # (2*W*IC, 2*NCp)
    bv = jnp.pad(jnp.tile(bias[:OC], 2 * Wo), (0, pad))
    bg = jnp.pad(jnp.tile(bias[OC:], 2 * Wo), (0, pad))
    b_packed = jnp.concatenate([bv, bg])[None, :]                       # (1, 2*NCp) f32
    return w_packed, b_packed, NC, NCp


# -----------------------------------------------------------------------------
# Spectral normalization (one power iteration per forward, like torch's wrapper).
# -----------------------------------------------------------------------------
def spectral_normalize(weight, u0, n_power_iterations=1, eps=1e-12):
    oc2 = weight.shape[0]
    w2 = weight.reshape(oc2, -1)
    u = u0 / (jnp.linalg.norm(u0) + eps)
    v = None
    for _ in range(n_power_iterations):
        v = w2.T @ u
        v = v / (jnp.linalg.norm(v) + eps)
        u = w2 @ v
        u = u / (jnp.linalg.norm(u) + eps)
    sigma = u @ (w2 @ v)
    return weight / sigma


def _pick_batch_tile(n, h):
    """Target MXU-sized M = B_TILE*(H-1), keep >=2 grid steps (v7x: 2 TCs)."""
    rows = h - 1
    target = max(1, 256 // rows)
    bt = max(1, min(target, n if n == 1 else n // 2))
    while n % bt:
        bt -= 1
    return bt


# -----------------------------------------------------------------------------
# GLUUpsampleBlock: parameters + forward
# -----------------------------------------------------------------------------
def init_glu_upsample_block_params(key, ic, oc, ks=3):
    kw, kb, ku = jax.random.split(key, 3)
    fan_in = ic * ks * ks
    bound = 1.0 / np.sqrt(fan_in)
    weight = jax.random.uniform(kw, (2 * oc, ic, ks, ks), jnp.float32, -bound, bound)
    bias = jax.random.uniform(kb, (2 * oc,), jnp.float32, -bound, bound)
    u0 = jax.random.normal(ku, (2 * oc,), jnp.float32)   # spectral-norm power-iter vector
    return {"weight": weight, "bias": bias, "u0": u0}


def glu_upsample_block_forward(params, x, nchw_out=True, out_dtype=jnp.float32):
    """x: (N, ic, H, W) NCHW -> (N, oc, 2H-2, 2W-2) NCHW (matching the torch module).

    nchw_out=False returns NHWC and skips the final full-tensor HBM transpose pass;
    out_dtype=jnp.bfloat16 halves kernel writeback bytes if downstream tolerates it.
    """
    N, IC, H, W = x.shape
    OC = params["weight"].shape[0] // 2
    Ho, Wo = 2 * H - 2, 2 * W - 2
    K0 = W * IC

    w_sn = spectral_normalize(params["weight"], params["u0"])
    w_packed, b_packed, NC, NCp = _build_fused_matrix(w_sn, params["bias"], W)

    # Boundary layout glue (smallest tensor): NCHW -> (N, H, W*IC) bf16 row slabs.
    x_r = jnp.transpose(x, (0, 2, 3, 1)).reshape(N, H, K0).astype(jnp.bfloat16)

    b_tile = _pick_batch_tile(N, H)
    grid = (N // b_tile,)

    # ---- VMEM budget (v7x: 64 MiB physical, 32 MiB default scoped limit) ----
    est = (w_packed.size * 2 + b_packed.size * 4            # single-buffered constants
           + 2 * b_tile * H * K0 * 2                        # double-buffered x (bf16)
           + 2 * b_tile * (H - 1) * NCp * np.dtype(out_dtype).itemsize
           + b_tile * (H - 1) * (2 * K0 * 2 + 3 * 2 * NCp * 4))  # in-kernel temps
    # TODO(synk): above this budget switch to a row-tiled per-tap accumulation kernel.
    if est > 48 * 1024 * 1024:
        raise NotImplementedError("folded-weight path exceeds the v7x VMEM budget")
    vmem_limit = int(min(max(2 * est, 32 * 1024 * 1024), 100 * 1024 * 1024))

    out = pl.pallas_call(
        _fused_glu_upconv_kernel,
        out_shape=jax.ShapeDtypeStruct((N, H - 1, NCp), out_dtype),
        grid_spec=pltpu.PrefetchScalarGridSpec(
            num_scalar_prefetch=0,
            grid=grid,
            in_specs=[
                pl.BlockSpec((b_tile, H, K0), lambda n: (n, 0, 0)),
                # Constant folded weight/bias: whole-array VMEM residents
                # (fetched once, no double buffering of never-changing blocks).
                pl.BlockSpec(memory_space=pltpu.MemorySpace.VMEM),
                pl.BlockSpec(memory_space=pltpu.MemorySpace.VMEM),
            ],
            out_specs=pl.BlockSpec((b_tile, H - 1, NCp), lambda n: (n, 0, 0)),
        ),
        compiler_params=pltpu.CompilerParams(
            dimension_semantics=("parallel",),
            vmem_limit_bytes=vmem_limit,
        ),
    )(x_r, w_packed, b_packed)

    # Lane-dense padded slab -> logical layout; pad columns sliced at the JAX boundary.
    out = out[..., :NC].reshape(N, Ho, Wo, OC)
    if nchw_out:
        # TODO(synk): NHWC-tolerant consumers should pass nchw_out=False to avoid
        # this extra full-tensor HBM read+write pass over the largest tensor.
        out = jnp.transpose(out, (0, 3, 1, 2))
    return out


# -----------------------------------------------------------------------------
# Pure-JAX reference (independent path: repeat-based nearest + lax.conv + GLU).
# -----------------------------------------------------------------------------
def _ref_forward(params, x):
    w_sn = spectral_normalize(params["weight"], params["u0"])
    x_up = jnp.repeat(jnp.repeat(x, 2, axis=2), 2, axis=3)   # nearest x2
    y = lax.conv_general_dilated(
        x_up, w_sn, (1, 1), "VALID",
        dimension_numbers=("NCHW", "OIHW", "NCHW"),
        precision=lax.Precision.HIGHEST)
    y = y + params["bias"][None, :, None, None]
    oc = y.shape[1] // 2
    return y[:, :oc] * jax.nn.sigmoid(y[:, oc:])              # GLU(dim=1)


if __name__ == "__main__":
    key = jax.random.PRNGKey(0)
    k_param, k_x = jax.random.split(key)
    N, IC, OC, H, W = 2, 4, 8, 16, 16

    params = init_glu_upsample_block_params(k_param, IC, OC)
    x = jax.random.normal(k_x, (N, IC, H, W), jnp.float32)

    out = jax.jit(glu_upsample_block_forward)(params, x)
    out = jax.block_until_ready(out)
    assert out.shape == (N, OC, 2 * H - 2, 2 * W - 2), out.shape

    ref = _ref_forward(params, x)
    # Both MXU operands (folded weights AND activations) are bf16 with f32
    # accumulation; the reference runs at HIGHEST precision, hence the tolerance.
    np.testing.assert_allclose(np.asarray(out), np.asarray(ref), rtol=4e-2, atol=4e-2)

    print("KERNEL_OK")
</pallas_src>

<mosaic_0001>
module attributes {stable_mosaic.version = 11 : i64} {
  func.func @_fused_glu_upconv_kernel(%arg0: i32, %arg1: memref<1x16x64xbf16, #tpu.memory_space<vmem>>, %arg2: memref<128x1024xbf16, #tpu.memory_space<vmem>>, %arg3: memref<1x1024xf32, #tpu.memory_space<vmem>>, %arg4: memref<1x15x512xf32, #tpu.memory_space<vmem>>) attributes {dimension_semantics = [#tpu.dimension_semantics<parallel>], iteration_bounds = array<i64: 2>, scalar_prefetch = 0 : i64, scratch_operands = 0 : i64, tpu.core_type = #tpu.core_type<tc>, window_params = [{transform_indices = @transform_0, window_bounds = array<i64: 1, 16, 64>}, {pipeline_mode = #tpu.pipeline_mode<synchronous>, transform_indices = @transform_1, window_bounds = array<i64: 128, 1024>}, {pipeline_mode = #tpu.pipeline_mode<synchronous>, transform_indices = @transform_2, window_bounds = array<i64: 1, 1024>}, {transform_indices = @transform_3, window_bounds = array<i64: 1, 15, 512>}]} {
    %c0 = arith.constant 0 : index
    %c0_0 = arith.constant 0 : index
    %c0_1 = arith.constant 0 : index
    %0 = vector.load %arg1[%c0, %c0_0, %c0_1] : memref<1x16x64xbf16, #tpu.memory_space<vmem>>, vector<1x16x64xbf16>
    %1 = vector.extract_strided_slice %0 {offsets = [0, 0, 0], sizes = [1, 15, 64], strides = [1, 1, 1]} : vector<1x16x64xbf16> to vector<1x15x64xbf16>
    %2 = vector.extract_strided_slice %0 {offsets = [0, 1, 0], sizes = [1, 15, 64], strides = [1, 1, 1]} : vector<1x16x64xbf16> to vector<1x15x64xbf16>
    %3 = tpu.concatenate %1, %2 in 2 : vector<1x15x64xbf16>, vector<1x15x64xbf16> -> vector<1x15x128xbf16>
    %4 = vector.shape_cast %3 : vector<1x15x128xbf16> to vector<15x128xbf16>
    %c0_2 = arith.constant 0 : index
    %c0_3 = arith.constant 0 : index
    %5 = vector.load %arg2[%c0_2, %c0_3] : memref<128x1024xbf16, #tpu.memory_space<vmem>>, vector<128x1024xbf16>
    %cst = arith.constant dense<0.000000e+00> : vector<15x1024xf32>
    %6 = tpu.matmul %4, %5, %cst {dimension_numbers = #tpu.dot_dimension_numbers<[1], [0], [0], [1], [0, 0, 1, 1], [], []>} : vector<15x128xbf16>, vector<128x1024xbf16>, vector<15x1024xf32> -> vector<15x1024xf32>
    %c0_4 = arith.constant 0 : index
    %c0_5 = arith.constant 0 : index
    %7 = vector.load %arg3[%c0_4, %c0_5] : memref<1x1024xf32, #tpu.memory_space<vmem>>, vector<1x1024xf32>
    %8 = vector.broadcast %7 : vector<1x1024xf32> to vector<15x1024xf32>
    %9 = arith.addf %6, %8 : vector<15x1024xf32>
    %10 = vector.extract_strided_slice %9 {offsets = [0, 0], sizes = [15, 512], strides = [1, 1]} : vector<15x1024xf32> to vector<15x512xf32>
    %11 = vector.extract_strided_slice %9 {offsets = [0, 512], sizes = [15, 512], strides = [1, 1]} : vector<15x1024xf32> to vector<15x512xf32>
    %12 = arith.negf %11 : vector<15x512xf32>
    %13 = math.exp %12 : vector<15x512xf32>
    %cst_6 = arith.constant 1.000000e+00 : f32
    %14 = vector.broadcast %cst_6 : f32 to vector<15x512xf32>
    %15 = arith.addf %14, %13 : vector<15x512xf32>
    %16 = arith.divf %14, %15 : vector<15x512xf32>
    %17 = arith.mulf %10, %16 : vector<15x512xf32>
    %18 = vector.shape_cast %17 : vector<15x512xf32> to vector<1x15x512xf32>
    %c0_7 = arith.constant 0 : index
    %c0_8 = arith.constant 0 : index
    %c0_9 = arith.constant 0 : index
    %19 = vector.load %arg4[%c0_7, %c0_8, %c0_9] : memref<1x15x512xf32, #tpu.memory_space<vmem>>, vector<1x15x512xf32>
    tpu.vector_store %arg4[%c0_7, %c0_8, %c0_9], %18 {strides = array<i32>} : memref<1x15x512xf32, #tpu.memory_space<vmem>>, vector<1x15x512xf32>,
    return
  }
  func.func @transform_0(%arg0: i32) -> (i32, i32, i32) {
    %c0_i32 = arith.constant 0 : i32
    %c0_i32_0 = arith.constant 0 : i32
    %c0_i32_1 = arith.constant 0 : i32
    return %arg0, %c0_i32, %c0_i32_0 : i32, i32, i32
  }
  func.func @transform_1(%arg0: i32) -> (i32, i32) {
    %c0_i32 = arith.constant 0 : i32
    %c0_i32_0 = arith.constant 0 : i32
    %c0_i32_1 = arith.constant 0 : i32
    return %c0_i32, %c0_i32_0 : i32, i32
  }
  func.func @transform_2(%arg0: i32) -> (i32, i32) {
    %c0_i32 = arith.constant 0 : i32
    %c0_i32_0 = arith.constant 0 : i32
    %c0_i32_1 = arith.constant 0 : i32
    return %c0_i32, %c0_i32_0 : i32, i32
  }
  func.func @transform_3(%arg0: i32) -> (i32, i32, i32) {
    %c0_i32 = arith.constant 0 : i32
    %c0_i32_0 = arith.constant 0 : i32
    %c0_i32_1 = arith.constant 0 : i32
    return %arg0, %c0_i32, %c0_i32_0 : i32, i32, i32
  }
}

</mosaic_0001>

<llo_original>
// kernel: tile.13
$region0: #{tile.13}
  #allocation0 [shape = 's32[1]{0}', space=sflag, size = 0x4, scoped, tag = 'scoped memory for tile.13']
  %s0 = inlined_call_operand.vmem [shape: f32[8], index: 0, kind: input, shape index: {}]
  %s1 = inlined_call_operand.vmem [shape: f32[60,8], index: 1, kind: output, shape index: {}]
  // Predicated region
  $region2: #{tile.13} parent=0 // pred_check
    _
  $region3: #{tile.13} parent=0 // pred_check_branch
    %3 = sbr.rel (0) target = $region5
  $region4: #{tile.13} parent=0 // pred_region
    _
  $region5: #{tile.13} parent=0 // pred_fallthru
    _
  %v4 = vld [vmem:[%s0] ss:$0 sm:$0xff]
  %5 = vst [vmem:[%s1] sm:$0xff] %v4
  %s6 = scalar_lea.vmem %s1, 8
  %7 = vst [vmem:[%s6] sm:$0xff] %v4
  %s8 = scalar_lea.vmem %s1, 16
  %9 = vst [vmem:[%s8] sm:$0xff] %v4
  %s10 = scalar_lea.vmem %s1, 24
  %11 = vst [vmem:[%s10] sm:$0xff] %v4
  %s12 = scalar_lea.vmem %s1, 32
  %13 = vst [vmem:[%s12] sm:$0xff] %v4
  %s14 = scalar_lea.vmem %s1, 40
  %15 = vst [vmem:[%s14] sm:$0xff] %v4
  %s16 = scalar_lea.vmem %s1, 48
  %17 = vst [vmem:[%s16] sm:$0xff] %v4
  %s18 = scalar_lea.vmem %s1, 56
  %19 = vst [vmem:[%s18] sm:$0xff] %v4

// kernel: tile.14
$region0: #{tile.14}
  %s0 = inlined_call_operand.vmem [shape: f32[60,8], index: 0, kind: input, shape index: {}]
  %s1 = inlined_call_operand.vmem [shape: f32[480], index: 1, kind: output, shape index: {}]
  $region1: #{tile.14} parent=0
    #allocation0 [shape = 'u8[4096]{0}', space=vmem, size = 0x1000, scoped, tag = 'scoped mem for output reshape']
    %s2 = smov 3
    %v3 = vld [vmem:[%s0] ss:$16 sm:%s2]
    %s4 = smov 12
    %v5 = vld [vmem:[%s0] ss:$16 sm:%s4]
    %vm6 = vcmask 1043458
    %v7 = vsel %vm6, %v5, %v3
    %vm8 = vcmask 64512
    %9 = vst.msk [vmem:[#allocation0] sm:$0xf] %vm8, %v7
    %s10 = scalar_lea.vmem %s0, 15
    %s11 = smov 3
    %v12 = vld [vmem:[%s10] ss:$16 sm:%s11]
    %s13 = scalar_lea.vmem %s0, 45
    %v14 = vld [vmem:[%s13] sm:$0x4]
    %vm15 = vcmask 1042434
    %v16 = vsel %vm15, %v14, %v12
    %17 = vrot.lane.b32.xlu0 %v16, 120
    %v18 = vpop.permute.xlu0 %17
    %vm19 = vcmask 1048512
    %20 = vst.msk [vmem:[#allocation0] sm:$0x7] %vm19, %v18
    %s21 = scalar_lea.vmem %s0, 14
    %s22 = smov 3
    %v23 = vld [vmem:[%s21] ss:$16 sm:%s22]
    %s24 = scalar_lea.vmem %s0, 44
    %v25 = vld [vmem:[%s24] sm:$0x4]
    %vm26 = vcmask 1042434
    %v27 = vsel %vm26, %v25, %v23
    %28 = vrot.lane.b32.xlu0 %v27, 112
    %v29 = vpop.permute.xlu0 %28
    %vm30 = vcmask 982912
    %31 = vst.msk [vmem:[#allocation0] sm:$0x7] %vm30, %v29
    %s32 = scalar_lea.vmem %s0, 13
    %s33 = smov 3
    %v34 = vld [vmem:[%s32] ss:$16 sm:%s33]
    %s35 = scalar_lea.vmem %s0, 43
    %v36 = vld [vmem:[%s35] sm:$0x4]
    %vm37 = vcmask 1042434
    %v38 = vsel %vm37, %v36, %v34
    %39 = vrot.lane.b32.xlu0 %v38, 104
    %v40 = vpop.permute.xlu0 %39
    %vm41 = vcmask 917312
    %42 = vst.msk [vmem:[#allocation0] sm:$0x7] %vm41, %v40
    %s43 = scalar_lea.vmem %s0, 12
    %s44 = smov 3
    %v45 = vld [vmem:[%s43] ss:$16 sm:%s44]
    %s46 = scalar_lea.vmem %s0, 42
    %v47 = vld [vmem:[%s46] sm:$0x4]
    %vm48 = vcmask 1042434
    %v49 = vsel %vm48, %v47, %v45
    %50 = vrot.lane.b32.xlu0 %v49, 96
    %v51 = vpop.permute.xlu0 %50
    %vm52 = vcmask 851712
    %53 = vst.msk [vmem:[#allocation0] sm:$0x7] %vm52, %v51
    %s54 = scalar_lea.vmem %s0, 11
    %s55 = smov 3
    %v56 = vld [vmem:[%s54] ss:$16 sm:%s55]
    %s57 = scalar_lea.vmem %s0, 11
    %s58 = smov 12
    %v59 = vld [vmem:[%s57] ss:$16 sm:%s58]
    %vm60 = vcmask 1043458
    %v61 = vsel %vm60, %v59, %v56
    %62 = vrot.lane.b32.xlu0 %v61, 88
    %v63 = vpop.permute.xlu0 %62
    %vm64 = vcmask 786112
    %65 = vst.msk [vmem:[#allocation0] sm:$0xf] %vm64, %v63
    %s66 = scalar_lea.vmem %s0, 10
    %s67 = smov 3
    %v68 = vld [vmem:[%s66] ss:$16 sm:%s67]
    %s69 = scalar_lea.vmem %s0, 10
    %s70 = smov 12
    %v71 = vld [vmem:[%s69] ss:$16 sm:%s70]
    %vm72 = vcmask 1043458
    %v73 = vsel %vm72, %v71, %v68
    %74 = vrot.lane.b32.xlu0 %v73, 80
    %v75 = vpop.permute.xlu0 %74
    %vm76 = vcmask 720512
    %77 = vst.msk [vmem:[#allocation0] sm:$0xf] %vm76, %v75
    %s78 = scalar_lea.vmem %s0, 9
    %s79 = smov 3
    %v80 = vld [vmem:[%s78] ss:$16 sm:%s79]
    %s81 = scalar_lea.vmem %s0, 9
    %s82 = smov 12
    %v83 = vld [vmem:[%s81] ss:$16 sm:%s82]
    %vm84 = vcmask 1043458
    %v85 = vsel %vm84, %v83, %v80
    %86 = vrot.lane.b32.xlu0 %v85, 72
    %v87 = vpop.permute.xlu0 %86
    %vm88 = vcmask 654912
    %89 = vst.msk [vmem:[#allocation0] sm:$0xf] %vm88, %v87
    %s90 = scalar_lea.vmem %s0, 8
    %s91 = smov 3
    %v92 = vld [vmem:[%s90] ss:$16 sm:%s91]
    %s93 = scalar_lea.vmem %s0, 8
    %s94 = smov 12
    %v95 = vld [vmem:[%s93] ss:$16 sm:%s94]
    %vm96 = vcmask 1043458
    %v97 = vsel %vm96, %v95, %v92
    %98 = vrot.lane.b32.xlu0 %v97, 64
    %v99 = vpop.permute.xlu0 %98
    %vm100 = vcmask 589312
    %101 = vst.msk [vmem:[#allocation0] sm:$0xf] %vm100, %v99
    %s102 = scalar_lea.vmem %s0, 7
    %s103 = smov 3
    %v104 = vld [vmem:[%s102] ss:$16 sm:%s103]
    %s105 = scalar_lea.vmem %s0, 7
    %s106 = smov 12
    %v107 = vld [vmem:[%s105] ss:$16 sm:%s106]
    %vm108 = vcmask 1043458
    %v109 = vsel %vm108, %v107, %v104
    %110 = vrot.lane.b32.xlu0 %v109, 56
    %v111 = vpop.permute.xlu0 %110
    %vm112 = vcmask 523712
    %113 = vst.msk [vmem:[#allocation0] sm:$0xf] %vm112, %v111
    %s114 = scalar_lea.vmem %s0, 6
    %s115 = smov 3
    %v116 = vld [vmem:[%s114] ss:$16 sm:%s115]
    %s117 = scalar_lea.vmem %s0, 6
    %s118 = smov 12
    %v119 = vld [vmem:[%s117] ss:$16 sm:%s118]
    %vm120 = vcmask 1043458
    %v121 = vsel %vm120, %v119, %v116
    %122 = vrot.lane.b32.xlu0 %v121, 48
    %v123 = vpop.permute.xlu0 %122
    %vm124 = vcmask 458112
    %125 = vst.msk [vmem:[#allocation0] sm:$0xf] %vm124, %v123
    %s126 = scalar_lea.vmem %s0, 5
    %s127 = smov 3
    %v128 = vld [vmem:[%s126] ss:$16 sm:%s127]
    %s129 = scalar_lea.vmem %s0, 5
    %s130 = smov 12
    %v131 = vld [vmem:[%s129] ss:$16 sm:%s130]
    %vm132 = vcmask 1043458
    %v133 = vsel %vm132, %v131, %v128
    %134 = vrot.lane.b32.xlu0 %v133, 40
    %v135 = vpop.permute.xlu0 %134
    %vm136 = vcmask 392512
    %137 = vst.msk [vmem:[#allocation0] sm:$0xf] %vm136, %v135
    %s138 = scalar_lea.vmem %s0, 4
    %s139 = smov 3
    %v140 = vld [vmem:[%s138] ss:$16 sm:%s139]
    %s141 = scalar_lea.vmem %s0, 4
    %s142 = smov 12
    %v143 = vld [vmem:[%s141] ss:$16 sm:%s142]
    %vm144 = vcmask 1043458
    %v145 = vsel %vm144, %v143, %v140
    %146 = vrot.lane.b32.xlu0 %v145, 32
    %v147 = vpop.permute.xlu0 %146
    %vm148 = vcmask 326912
    %149 = vst.msk [vmem:[#allocation0] sm:$0xf] %vm148, %v147
    %s150 = scalar_lea.vmem %s0, 3
    %s151 = smov 3
    %v152 = vld [vmem:[%s150] ss:$16 sm:%s151]
    %s153 = scalar_lea.vmem %s0, 3
    %s154 = smov 12
    %v155 = vld [vmem:[%s153] ss:$16 sm:%s154]
    %vm156 = vcmask 1043458
    %v157 = vsel %vm156, %v155, %v152
    %158 = vrot.lane.b32.xlu0 %v157, 24
    %v159 = vpop.permute.xlu0 %158
    %vm160 = vcmask 261312
    %161 = vst.msk [vmem:[#allocation0] sm:$0xf] %vm160, %v159
    %s162 = scalar_lea.vmem %s0, 2
    %s163 = smov 3
    %v164 = vld [vmem:[%s162] ss:$16 sm:%s163]
    %s165 = scalar_lea.vmem %s0, 2
    %s166 = smov 12
    %v167 = vld [vmem:[%s165] ss:$16 sm:%s166]
    %vm168 = vcmask 1043458
    %v169 = vsel %vm168, %v167, %v164
    %170 = vrot.lane.b32.xlu0 %v169, 16
    %v171 = vpop.permute.xlu0 %170
    %vm172 = vcmask 195712
    %173 = vst.msk [vmem:[#allocation0] sm:$0xf] %vm172, %v171
    %s174 = scalar_lea.vmem %s0, 1
    %s175 = smov 3
    %v176 = vld [vmem:[%s174] ss:$16 sm:%s175]
    %s177 = scalar_lea.vmem %s0, 1
    %s178 = smov 12
    %v179 = vld [vmem:[%s177] ss:$16 sm:%s178]
    %vm180 = vcmask 1043458
    %v181 = vsel %vm180, %v179, %v176
    %182 = vrot.lane.b32.xlu0 %v181, 8
    %v183 = vpop.permute.xlu0 %182
    %vm184 = vcmask 130112
    %185 = vst.msk [vmem:[#allocation0] sm:$0xf] %vm184, %v183
    %s187 = sshllo.u32 0, 4
    %v189 = vld [vmem:[#allocation0] sm:%s187]
    %s190 = sshllo.u32 0, 4
    %191 = vst [vmem:[%s1] sm:%s190] %v189

// kernel: glu_upsample_block_forward.1
$region0: #{glu_upsample_block_forward.1}
  #allocation0 [shape = 'u32[]', space=smem, size = 0x4, offset = 0x4, fixed_abs, tag = 'smem constant byte address 0x4 - core index']
  #allocation1 [shape = 'u32[144,128]{1,0:T(1,128)}', space=vmem, size = 0x12000, scoped, tag = 'internal scratch']
  %s0 = inlined_call_operand.vmem [shape: bf16[2,16,64], index: 0, kind: input, shape index: {}]
  %s1 = inlined_call_operand.vmem [shape: bf16[128,1024], index: 1, kind: input, shape index: {}]
  %s2 = inlined_call_operand.vmem [shape: f32[1,1024], index: 2, kind: input, shape index: {}]
  %s3 = inlined_call_operand.vmem [shape: f32[2,15,512], index: 3, kind: output, shape index: {}]
  %s4 = sld [smem:[#allocation0]]
  $region45: #{glu_upsample_block_forward.1} parent=0
    _
  %s6 = ssub.s32 1, %s4
  %s7 = scalar_select 0, %s6, %s4
  loop: start=0, step=1, limit=4
  $region2: #{glu_upsample_block_forward.1} parent=0 // loop_pre_header
    _
  $region3: #{glu_upsample_block_forward.1} parent=0 // loop_header
    %s9 = sphi 0, %s13
    %p10 = scmp.ge.s32.totalorder %s9, 4
    %s19 = sphi 0, %s21
    %s22 = sphi 0, %s19
    %s23 = sphi 0, %s22
    %s39 = sphi 0, %s23
    %s43 = sphi 0, %s43
    %s45 = sphi 0, %s43
    %s46 = sphi 0, %s45
    %s60 = sphi 0, %s46
    %s64 = sphi 0, %s64
    %s66 = sphi 0, %s64
    %s67 = sphi 0, %s66
    %s81 = sphi 0, %s67
    %s87 = sphi 0, %s89
    %s90 = sphi 0, %s87
    %s91 = sphi 0, %s90
    %s107 = sphi 0, %s91
  $region4: #{glu_upsample_block_forward.1} parent=0 // loop_header_branch
    %12 = sbr.rel (%p10) target = $region8
  $region5: #{glu_upsample_block_forward.1} parent=0 // loop_body
    %s14 = ssub.s32 %s9, 1
    %s15 = ssub.s32 %s9, 2
    %s16 = sadd.s32 %s9, 1
    %s17 = ssub.s32 %s9, %s16
    %p18 = scmp.eq.s32.totalorder %s17, 0
    %s20 = sadd.s32 %s19, 1
    %s21 = scalar_select %p18, %s19, %s20
    %p24 = pneg %p18
    %p25 = scmp.eq.s32.totalorder %s9, 1
    %p26 = por %p24, %p25
    %p27 = scmp.ne.s32.totalorder %s19, %s22
    %p28 = scmp.eq.s32.totalorder %s9, 0
    %p29 = por %p27, %p28
    %p30 = scmp.ne.s32.totalorder %s19, %s22
    %p31 = scmp.eq.s32.totalorder %s14, 1
    %p32 = por %p30, %p31
    %p33 = scmp.ne.s32.totalorder %s22, %s23
    %p34 = scmp.eq.s32.totalorder %s14, 0
    %p35 = por %p33, %p34
    %p36 = scmp.ne.s32.totalorder %s22, %s23
    %p37 = scmp.eq.s32.totalorder %s15, 1
    %p38 = por %p36, %p37
    %p40 = scmp.ne.s32.totalorder %s23, %s39
    %p41 = scmp.eq.s32.totalorder %s15, 0
    %p42 = por %p40, %p41
    %s44 = sadd.s32 %s43, 1
    %p47 = scmp.eq.s32.totalorder %s9, 1
    %p48 = scmp.ne.s32.totalorder %s43, %s45
    %p49 = scmp.eq.s32.totalorder %s9, 0
    %p50 = por %p48, %p49
    %p51 = scmp.ne.s32.totalorder %s43, %s45
    %p52 = scmp.eq.s32.totalorder %s14, 1
    %p53 = por %p51, %p52
    %p54 = scmp.ne.s32.totalorder %s45, %s46
    %p55 = scmp.eq.s32.totalorder %s14, 0
    %p56 = por %p54, %p55
    %p57 = scmp.ne.s32.totalorder %s45, %s46
    %p58 = scmp.eq.s32.totalorder %s15, 1
    %p59 = por %p57, %p58
    %p61 = scmp.ne.s32.totalorder %s46, %s60
    %p62 = scmp.eq.s32.totalorder %s15, 0
    %p63 = por %p61, %p62
    %s65 = sadd.s32 %s64, 1
    %p68 = scmp.eq.s32.totalorder %s9, 1
    %p69 = scmp.ne.s32.totalorder %s64, %s66
    %p70 = scmp.eq.s32.totalorder %s9, 0
    %p71 = por %p69, %p70
    %p72 = scmp.ne.s32.totalorder %s64, %s66
    %p73 = scmp.eq.s32.totalorder %s14, 1
    %p74 = por %p72, %p73
    %p75 = scmp.ne.s32.totalorder %s66, %s67
    %p76 = scmp.eq.s32.totalorder %s14, 0
    %p77 = por %p75, %p76
    %p78 = scmp.ne.s32.totalorder %s66, %s67
    %p79 = scmp.eq.s32.totalorder %s15, 1
    %p80 = por %p78, %p79
    %p82 = scmp.ne.s32.totalorder %s67, %s81
    %p83 = scmp.eq.s32.totalorder %s15, 0
    %p84 = por %p82, %p83
    %s85 = ssub.s32 %s9, %s16
    %p86 = scmp.eq.s32.totalorder %s85, 0
    %s88 = sadd.s32 %s87, 1
    %s89 = scalar_select %p86, %s87, %s88
    %p92 = pneg %p86
    %p93 = scmp.eq.s32.totalorder %s9, 1
    %p94 = por %p92, %p93
    %p95 = scmp.ne.s32.totalorder %s87, %s90
    %p96 = scmp.eq.s32.totalorder %s9, 0
    %p97 = por %p95, %p96
    %p98 = scmp.ne.s32.totalorder %s87, %s90
    %p99 = scmp.eq.s32.totalorder %s14, 1
    %p100 = por %p98, %p99
    %p101 = scmp.ne.s32.totalorder %s90, %s91
    %p102 = scmp.eq.s32.totalorder %s14, 0
    %p103 = por %p101, %p102
    %p104 = scmp.ne.s32.totalorder %s90, %s91
    %p105 = scmp.eq.s32.totalorder %s15, 1
    %p106 = por %p104, %p105
    %p108 = scmp.ne.s32.totalorder %s91, %s107
    %p109 = scmp.eq.s32.totalorder %s15, 0
    %p110 = por %p108, %p109
    %p111 = scmp.le.s32.totalorder 1, %s9
    %p112 = scmp.lt.s32.totalorder %s9, 3
    %p113 = pnand %p111, %p112
    %p114 = pneg %p113
    // Predicated region
    $region9: #{glu_upsample_block_forward.1} parent=5 // pred_check
      _
    $region10: #{glu_upsample_block_forward.1} parent=5 // pred_check_branch
      %116 = sbr.rel (%p113) target = $region12
    $region11: #{glu_upsample_block_forward.1} parent=5 // pred_region
      %s117 = ssub.s32 %s9, 1
      // Predicated region
      $region13: #{glu_upsample_block_forward.1} parent=11 // pred_check
        %p118 = pneg %p56
      $region14: #{glu_upsample_block_forward.1} parent=11 // pred_check_branch
        %120 = sbr.rel (%p118) target = $region16
      $region15: #{glu_upsample_block_forward.1} parent=11 // pred_region
        _
      $region16: #{glu_upsample_block_forward.1} parent=11 // pred_fallthru
        _
      // Predicated region
      $region17: #{glu_upsample_block_forward.1} parent=11 // pred_check
        %p121 = pneg %p77
      $region18: #{glu_upsample_block_forward.1} parent=11 // pred_check_branch
        %123 = sbr.rel (%p121) target = $region20
      $region19: #{glu_upsample_block_forward.1} parent=11 // pred_region
        _
      $region20: #{glu_upsample_block_forward.1} parent=11 // pred_fallthru
        _
    $region12: #{glu_upsample_block_forward.1} parent=5 // pred_fallthru
      _
    %p124 = scmp.lt.s32.totalorder %s9, 2
    // Predicated region
    $region21: #{glu_upsample_block_forward.1} parent=5 // pred_check
      %p125 = pneg %p124
    $region22: #{glu_upsample_block_forward.1} parent=5 // pred_check_branch
      %127 = sbr.rel (%p125) target = $region24
    $region23: #{glu_upsample_block_forward.1} parent=5 // pred_region
      // Predicated region
      $region25: #{glu_upsample_block_forward.1} parent=23 // pred_check
        %p128 = pneg %p29
      $region26: #{glu_upsample_block_forward.1} parent=23 // pred_check_branch
        %130 = sbr.rel (%p128) target = $region28
      $region27: #{glu_upsample_block_forward.1} parent=23 // pred_region
        %p131 = scmp.lt.s32.totalorder %s9, 1
        %s132 = scalar_select %p131, %s9, 1
        %s133 = smul.addr %s132, 2
        %s134 = smul.addr %s133, 4
        %s135 = scalar_lea.vmem %s0, %s134
      $region28: #{glu_upsample_block_forward.1} parent=23 // pred_fallthru
        _
    $region24: #{glu_upsample_block_forward.1} parent=5 // pred_fallthru
      _
    %p136 = scmp.le.s32.totalorder 1, %s9
    %p137 = scmp.lt.s32.totalorder %s9, 3
    %p138 = pnand %p136, %p137
    %p139 = pneg %p138
    // Predicated region
    $region29: #{glu_upsample_block_forward.1} parent=5 // pred_check
      _
    $region30: #{glu_upsample_block_forward.1} parent=5 // pred_check_branch
      %141 = sbr.rel (%p138) target = $region32
    $region31: #{glu_upsample_block_forward.1} parent=5 // pred_region
      %s142 = ssub.s32 %s9, 1
      %p143 = scmp.lt.s32.totalorder %s14, 1
      %s144 = scalar_select %p143, %s14, 1
      %s145 = smul.addr %s144, 2
      %s146 = smul.addr %s145, 4
      %s147 = scalar_lea.vmem %s0, %s146
      %p148 = pneg %p35
      %p149 = pneg %p32
      %p150 = pneg %p56
      %p151 = pneg %p53
      %p152 = pneg %p77
      %p153 = pneg %p74
      %p154 = pneg %p103
      %p155 = pneg %p100
      %p156 = scmp.lt.s32.totalorder %s14, 1
      %s157 = scalar_select %p156, %s14, 1
      %s158 = smul.addr %s157, 8
      %s159 = smul.addr %s158, 8
      %s160 = scalar_lea.vmem %s3, %s159
      %p161 = scmp.lt.s32.totalorder %s14, 1
      %s162 = scalar_select %p161, %s14, 1
      %s163 = smul.addr %s162, 2
      %s164 = smul.addr %s163, 4
      %s165 = scalar_lea.vmem %s0, %s164
      %p166 = scmp.lt.s32.totalorder %s14, 1
      %s167 = scalar_select %p166, %s14, 1
      %s168 = smul.addr %s167, 8
      %s169 = smul.addr %s168, 8
      %s170 = scalar_lea.vmem %s3, %s169
      %v172 = vld [vmem:[%s165] sm:$0xf]
      %v173 = vld [vmem:[%s165 + $0x4] sm:$0xf]
      %v176 = vunpack.c.l.b16 %v172
      %v177 = vunpack.c.l.b16 %v173
      %v178 = vpack.c.b16 %v177, %v176
      %v180 = vshrl.u32 %v178, 16
      %v182 = vshll.u32 %v178, 16
      %v184 = vrot.slane %v182, 1
      %v185 = vor.u32 %v180, %v184
      %186 = vrot.lane.b32.xlu0 %v185, 64
      %v187 = vpop.permute.xlu0 %186
      %vm188 = vcmask 523264
      %v190 = vsel %vm188, %v178, %v187
      %v192 = vld [vmem:[%s1] sm:$0xff]
      %v193 = vld [vmem:[%s1 + $0x8] sm:$0xff]
      %v194 = vld [vmem:[%s1 + $0x10] sm:$0xff]
      %v195 = vld [vmem:[%s1 + $0x18] sm:$0xff]
      %v196 = vld [vmem:[%s1 + $0x20] sm:$0xff]
      %v197 = vld [vmem:[%s1 + $0x28] sm:$0xff]
      %v198 = vld [vmem:[%s1 + $0x30] sm:$0xff]
      %v199 = vld [vmem:[%s1 + $0x38] sm:$0xff]
      %v200 = vld [vmem:[%s1 + $0x40] sm:$0xff]
      %v201 = vld [vmem:[%s1 + $0x48] sm:$0xff]
      %v202 = vld [vmem:[%s1 + $0x50] sm:$0xff]
      %v203 = vld [vmem:[%s1 + $0x58] sm:$0xff]
      %v204 = vld [vmem:[%s1 + $0x60] sm:$0xff]
      %v205 = vld [vmem:[%s1 + $0x68] sm:$0xff]
      %v206 = vld [vmem:[%s1 + $0x70] sm:$0xff]
      %v207 = vld [vmem:[%s1 + $0x78] sm:$0xff]
      %v208 = vld [vmem:[%s1 + $0x80] sm:$0xff]
      %v209 = vld [vmem:[%s1 + $0x88] sm:$0xff]
      %v210 = vld [vmem:[%s1 + $0x90] sm:$0xff]
      %v211 = vld [vmem:[%s1 + $0x98] sm:$0xff]
      %v212 = vld [vmem:[%s1 + $0xa0] sm:$0xff]
      %v213 = vld [vmem:[%s1 + $0xa8] sm:$0xff]
      %v214 = vld [vmem:[%s1 + $0xb0] sm:$0xff]
      %v215 = vld [vmem:[%s1 + $0xb8] sm:$0xff]
      %v216 = vld [vmem:[%s1 + $0xc0] sm:$0xff]
      %v217 = vld [vmem:[%s1 + $0xc8] sm:$0xff]
      %v218 = vld [vmem:[%s1 + $0xd0] sm:$0xff]
      %v219 = vld [vmem:[%s1 + $0xd8] sm:$0xff]
      %v220 = vld [vmem:[%s1 + $0xe0] sm:$0xff]
      %v221 = vld [vmem:[%s1 + $0xe8] sm:$0xff]
      %v222 = vld [vmem:[%s1 + $0xf0] sm:$0xff]
      %v223 = vld [vmem:[%s1 + $0xf8] sm:$0xff]
      %v224 = vld [vmem:[%s1 + $0x100] sm:$0xff]
      %v225 = vld [vmem:[%s1 + $0x108] sm:$0xff]
      %v226 = vld [vmem:[%s1 + $0x110] sm:$0xff]
      %v227 = vld [vmem:[%s1 + $0x118] sm:$0xff]
      %v228 = vld [vmem:[%s1 + $0x120] sm:$0xff]
      %v229 = vld [vmem:[%s1 + $0x128] sm:$0xff]
      %v230 = vld [vmem:[%s1 + $0x130] sm:$0xff]
      %v231 = vld [vmem:[%s1 + $0x138] sm:$0xff]
      %v232 = vld [vmem:[%s1 + $0x140] sm:$0xff]
      %v233 = vld [vmem:[%s1 + $0x148] sm:$0xff]
      %v234 = vld [vmem:[%s1 + $0x150] sm:$0xff]
      %v235 = vld [vmem:[%s1 + $0x158] sm:$0xff]
      %v236 = vld [vmem:[%s1 + $0x160] sm:$0xff]
      %v237 = vld [vmem:[%s1 + $0x168] sm:$0xff]
      %v238 = vld [vmem:[%s1 + $0x170] sm:$0xff]
      %v239 = vld [vmem:[%s1 + $0x178] sm:$0xff]
      %v240 = vld [vmem:[%s1 + $0x180] sm:$0xff]
      %v241 = vld [vmem:[%s1 + $0x188] sm:$0xff]
      %v242 = vld [vmem:[%s1 + $0x190] sm:$0xff]
      %v243 = vld [vmem:[%s1 + $0x198] sm:$0xff]
      %v244 = vld [vmem:[%s1 + $0x1a0] sm:$0xff]
      %v245 = vld [vmem:[%s1 + $0x1a8] sm:$0xff]
      %v246 = vld [vmem:[%s1 + $0x1b0] sm:$0xff]
      %v247 = vld [vmem:[%s1 + $0x1b8] sm:$0xff]
      %v248 = vld [vmem:[%s1 + $0x1c0] sm:$0xff]
      %v249 = vld [vmem:[%s1 + $0x1c8] sm:$0xff]
      %v250 = vld [vmem:[%s1 + $0x1d0] sm:$0xff]
      %v251 = vld [vmem:[%s1 + $0x1d8] sm:$0xff]
      %v252 = vld [vmem:[%s1 + $0x1e0] sm:$0xff]
      %v253 = vld [vmem:[%s1 + $0x1e8] sm:$0xff]
      %v254 = vld [vmem:[%s1 + $0x1f0] sm:$0xff]
      %v255 = vld [vmem:[%s1 + $0x1f8] sm:$0xff]
      %v256 = vld [vmem:[%s2] sm:$0xff]
      %v258 = vlaneseq
      %v259 = vshrl.u32 %v258, 7
      %v260 = vsub.s32 0, %v259
      %v261 = vrot.slane %v256, %v260
      %v262 = vlaneseq
      %v263 = vshrl.u32 %v262, 7
      %v264 = vsub.s32 1, %v263
      %v265 = vrot.slane %v256, %v264
      %v266 = vlaneseq
      %v267 = vshrl.u32 %v266, 7
      %v268 = vsub.s32 2, %v267
      %v269 = vrot.slane %v256, %v268
      %v270 = vlaneseq
      %v271 = vshrl.u32 %v270, 7
      %v272 = vsub.s32 3, %v271
      %v273 = vrot.slane %v256, %v272
      %v274 = vlaneseq
      %v275 = vshrl.u32 %v274, 7
      %v276 = vsub.s32 4, %v275
      %v277 = vrot.slane %v256, %v276
      %v278 = vlaneseq
      %v279 = vshrl.u32 %v278, 7
      %v280 = vsub.s32 5, %v279
      %v281 = vrot.slane %v256, %v280
      %v282 = vlaneseq
      %v283 = vshrl.u32 %v282, 7
      %v284 = vsub.s32 6, %v283
      %v285 = vrot.slane %v256, %v284
      %v286 = vlaneseq
      %v287 = vshrl.u32 %v286, 7
      %v288 = vsub.s32 7, %v287
      %v289 = vrot.slane %v256, %v288
      %v362 = vunpack.c.l.b16 %v192
      %v363 = vunpack.c.h.b16 %v192
      %v364 = vunpack.c.l.b16 %v193
      %v365 = vunpack.c.h.b16 %v193
      %v366 = vunpack.c.l.b16 %v194
      %v367 = vunpack.c.h.b16 %v194
      %v368 = vunpack.c.l.b16 %v195
      %v369 = vunpack.c.h.b16 %v195
      %v370 = vunpack.c.l.b16 %v196
      %v371 = vunpack.c.h.b16 %v196
      %v372 = vunpack.c.l.b16 %v197
      %v373 = vunpack.c.h.b16 %v197
      %v374 = vunpack.c.l.b16 %v198
      %v375 = vunpack.c.h.b16 %v198
      %v376 = vunpack.c.l.b16 %v199
      %v377 = vunpack.c.h.b16 %v199
      %v378 = vunpack.c.l.b16 %v200
      %v379 = vunpack.c.h.b16 %v200
      %v380 = vunpack.c.l.b16 %v201
      %v381 = vunpack.c.h.b16 %v201
      %v382 = vunpack.c.l.b16 %v202
      %v383 = vunpack.c.h.b16 %v202
      %v384 = vunpack.c.l.b16 %v203
      %v385 = vunpack.c.h.b16 %v203
      %v386 = vunpack.c.l.b16 %v204
      %v387 = vunpack.c.h.b16 %v204
      %v388 = vunpack.c.l.b16 %v205
      %v389 = vunpack.c.h.b16 %v205
      %v390 = vunpack.c.l.b16 %v206
      %v391 = vunpack.c.h.b16 %v206
      %v392 = vunpack.c.l.b16 %v207
      %v393 = vunpack.c.h.b16 %v207
      %v394 = vunpack.c.l.b16 %v208
      %v395 = vunpack.c.h.b16 %v208
      %v396 = vunpack.c.l.b16 %v209
      %v397 = vunpack.c.h.b16 %v209
      %v398 = vunpack.c.l.b16 %v210
      %v399 = vunpack.c.h.b16 %v210
      %v400 = vunpack.c.l.b16 %v211
      %v401 = vunpack.c.h.b16 %v211
      %v402 = vunpack.c.l.b16 %v212
      %v403 = vunpack.c.h.b16 %v212
      %v404 = vunpack.c.l.b16 %v213
      %v405 = vunpack.c.h.b16 %v213
      %v406 = vunpack.c.l.b16 %v214
      %v407 = vunpack.c.h.b16 %v214
      %v408 = vunpack.c.l.b16 %v215
      %v409 = vunpack.c.h.b16 %v215
      %v410 = vunpack.c.l.b16 %v216
      %v411 = vunpack.c.h.b16 %v216
      %v412 = vunpack.c.l.b16 %v217
      %v413 = vunpack.c.h.b16 %v217
      %v414 = vunpack.c.l.b16 %v218
      %v415 = vunpack.c.h.b16 %v218
      %v416 = vunpack.c.l.b16 %v219
      %v417 = vunpack.c.h.b16 %v219
      %v418 = vunpack.c.l.b16 %v220
      %v419 = vunpack.c.h.b16 %v220
      %v420 = vunpack.c.l.b16 %v221
      %v421 = vunpack.c.h.b16 %v221
      %v422 = vunpack.c.l.b16 %v222
      %v423 = vunpack.c.h.b16 %v222
      %v424 = vunpack.c.l.b16 %v223
      %v425 = vunpack.c.h.b16 %v223
      %v426 = vunpack.c.l.b16 %v224
      %v427 = vunpack.c.h.b16 %v224
      %v428 = vunpack.c.l.b16 %v225
      %v429 = vunpack.c.h.b16 %v225
      %v430 = vunpack.c.l.b16 %v226
      %v431 = vunpack.c.h.b16 %v226
      %v432 = vunpack.c.l.b16 %v227
      %v433 = vunpack.c.h.b16 %v227
      %v434 = vunpack.c.l.b16 %v228
      %v435 = vunpack.c.h.b16 %v228
      %v436 = vunpack.c.l.b16 %v229
      %v437 = vunpack.c.h.b16 %v229
      %v438 = vunpack.c.l.b16 %v230
      %v439 = vunpack.c.h.b16 %v230
      %v440 = vunpack.c.l.b16 %v231
      %v441 = vunpack.c.h.b16 %v231
      %v442 = vunpack.c.l.b16 %v232
      %v443 = vunpack.c.h.b16 %v232
      %v444 = vunpack.c.l.b16 %v233
      %v445 = vunpack.c.h.b16 %v233
      %v446 = vunpack.c.l.b16 %v234
      %v447 = vunpack.c.h.b16 %v234
      %v448 = vunpack.c.l.b16 %v235
      %v449 = vunpack.c.h.b16 %v235
      %v450 = vunpack.c.l.b16 %v236
      %v451 = vunpack.c.h.b16 %v236
      %v452 = vunpack.c.l.b16 %v237
      %v453 = vunpack.c.h.b16 %v237
      %v454 = vunpack.c.l.b16 %v238
      %v455 = vunpack.c.h.b16 %v238
      %v456 = vunpack.c.l.b16 %v239
      %v457 = vunpack.c.h.b16 %v239
      %v458 = vunpack.c.l.b16 %v240
      %v459 = vunpack.c.h.b16 %v240
      %v460 = vunpack.c.l.b16 %v241
      %v461 = vunpack.c.h.b16 %v241
      %v462 = vunpack.c.l.b16 %v242
      %v463 = vunpack.c.h.b16 %v242
      %v464 = vunpack.c.l.b16 %v243
      %v465 = vunpack.c.h.b16 %v243
      %v466 = vunpack.c.l.b16 %v244
      %v467 = vunpack.c.h.b16 %v244
      %v468 = vunpack.c.l.b16 %v245
      %v469 = vunpack.c.h.b16 %v245
      %v470 = vunpack.c.l.b16 %v246
      %v471 = vunpack.c.h.b16 %v246
      %v472 = vunpack.c.l.b16 %v247
      %v473 = vunpack.c.h.b16 %v247
      %v474 = vunpack.c.l.b16 %v248
      %v475 = vunpack.c.h.b16 %v248
      %v476 = vunpack.c.l.b16 %v249
      %v477 = vunpack.c.h.b16 %v249
      %v478 = vunpack.c.l.b16 %v250
      %v479 = vunpack.c.h.b16 %v250
      %v480 = vunpack.c.l.b16 %v251
      %v481 = vunpack.c.h.b16 %v251
      %v482 = vunpack.c.l.b16 %v252
      %v483 = vunpack.c.h.b16 %v252
      %v484 = vunpack.c.l.b16 %v253
      %v485 = vunpack.c.h.b16 %v253
      %v486 = vunpack.c.l.b16 %v254
      %v487 = vunpack.c.h.b16 %v254
      %v488 = vunpack.c.l.b16 %v255
      %v489 = vunpack.c.h.b16 %v255
      %v490 = vpack.c.b16 %v370, %v362
      %v491 = vpack.c.b16 %v371, %v363
      %v492 = vpack.c.b16 %v372, %v364
      %v493 = vpack.c.b16 %v373, %v365
      %v494 = vpack.c.b16 %v374, %v366
      %v495 = vpack.c.b16 %v375, %v367
      %v496 = vpack.c.b16 %v376, %v368
      %v497 = vpack.c.b16 %v377, %v369
      %v498 = vpack.c.b16 %v386, %v378
      %v499 = vpack.c.b16 %v387, %v379
      %v500 = vpack.c.b16 %v388, %v380
      %v501 = vpack.c.b16 %v389, %v381
      %v502 = vpack.c.b16 %v390, %v382
      %v503 = vpack.c.b16 %v391, %v383
      %v504 = vpack.c.b16 %v392, %v384
      %v505 = vpack.c.b16 %v393, %v385
      %v506 = vpack.c.b16 %v402, %v394
      %v507 = vpack.c.b16 %v403, %v395
      %v508 = vpack.c.b16 %v404, %v396
      %v509 = vpack.c.b16 %v405, %v397
      %v510 = vpack.c.b16 %v406, %v398
      %v511 = vpack.c.b16 %v407, %v399
      %v512 = vpack.c.b16 %v408, %v400
      %v513 = vpack.c.b16 %v409, %v401
      %v514 = vpack.c.b16 %v418, %v410
      %v515 = vpack.c.b16 %v419, %v411
      %v516 = vpack.c.b16 %v420, %v412
      %v517 = vpack.c.b16 %v421, %v413
      %v518 = vpack.c.b16 %v422, %v414
      %v519 = vpack.c.b16 %v423, %v415
      %v520 = vpack.c.b16 %v424, %v416
      %v521 = vpack.c.b16 %v425, %v417
      %v522 = vpack.c.b16 %v434, %v426
      %v523 = vpack.c.b16 %v435, %v427
      %v524 = vpack.c.b16 %v436, %v428
      %v525 = vpack.c.b16 %v437, %v429
      %v526 = vpack.c.b16 %v438, %v430
      %v527 = vpack.c.b16 %v439, %v431
      %v528 = vpack.c.b16 %v440, %v432
      %v529 = vpack.c.b16 %v441, %v433
      %v530 = vpack.c.b16 %v450, %v442
      %v531 = vpack.c.b16 %v451, %v443
      %v532 = vpack.c.b16 %v452, %v444
      %v533 = vpack.c.b16 %v453, %v445
      %v534 = vpack.c.b16 %v454, %v446
      %v535 = vpack.c.b16 %v455, %v447
      %v536 = vpack.c.b16 %v456, %v448
      %v537 = vpack.c.b16 %v457, %v449
      %v538 = vpack.c.b16 %v466, %v458
      %v539 = vpack.c.b16 %v467, %v459
      %v540 = vpack.c.b16 %v468, %v460
      %v541 = vpack.c.b16 %v469, %v461
      %v542 = vpack.c.b16 %v470, %v462
      %v543 = vpack.c.b16 %v471, %v463
      %v544 = vpack.c.b16 %v472, %v464
      %v545 = vpack.c.b16 %v473, %v465
      %v546 = vpack.c.b16 %v482, %v474
      %v547 = vpack.c.b16 %v483, %v475
      %v548 = vpack.c.b16 %v484, %v476
      %v549 = vpack.c.b16 %v485, %v477
      %v550 = vpack.c.b16 %v486, %v478
      %v551 = vpack.c.b16 %v487, %v479
      %v552 = vpack.c.b16 %v488, %v480
      %v553 = vpack.c.b16 %v489, %v481
      %618 = vmatprep.subr.bf16.mxu0 %v491
      %619 = vmatpush1.bf16.msra.mxu0 %v490
      %620 = vmatprep.subr.bf16.mxu0 %v499
      %621 = vmatpush1.bf16.msra.mxu0 %v498
      %622 = vmatprep.subr.bf16.mxu0 %v507
      %623 = vmatpush1.bf16.msra.mxu0 %v506
      %624 = vmatprep.subr.bf16.mxu0 %v515
      %625 = vmatpush1.bf16.msra.mxu0 %v514
      %626 = vmatprep.subr.bf16.mxu0 %v523
      %627 = vmatpush1.bf16.msra.mxu0 %v522
      %628 = vmatprep.subr.bf16.mxu0 %v531
      %629 = vmatpush1.bf16.msra.mxu0 %v530
      %630 = vmatprep.subr.bf16.mxu0 %v539
      %631 = vmatpush1.bf16.msra.mxu0 %v538
      %632 = vmatprep.subr.bf16.mxu0 %v547
      %633 = vmatpush1.bf16.msra.mxu0 %v546
      %634 = vmatprep.subr.bf16.mxu0 0
      %635 = vmatpush1.bf16.msra.mxu0 0
      %636 = vmatprep.subr.bf16.mxu0 0
      %637 = vmatpush1.bf16.msra.mxu0 0
      %638 = vmatprep.subr.bf16.mxu0 0
      %639 = vmatpush1.bf16.msra.mxu0 0
      %640 = vmatprep.subr.bf16.mxu0 0
      %641 = vmatpush1.bf16.msra.mxu0 0
      %642 = vmatprep.subr.bf16.mxu0 0
      %643 = vmatpush1.bf16.msra.mxu0 0
      %644 = vmatprep.subr.bf16.mxu0 0
      %645 = vmatpush1.bf16.msra.mxu0 0
      %646 = vmatprep.subr.bf16.mxu0 0
      %647 = vmatpush1.bf16.msra.mxu0 0
      %648 = vmatprep.subr.bf16.mxu0 0
      %649 = vmatpush1.bf16.msra.mxu0 0
      %650 = vmatprep.mubr.bf16.mxu0 0
      %651 = vmatmul.mubr.bf16.gmra.mrb[0].mxu0 %v190
      %v652 = vpop.f32.mrb[0].mxu0
      %v653 = vadd.f32 %v261, %v652
      %v654 = vpop.f32.mrb[0].mxu0
      %v655 = vadd.f32 %v265, %v654
      %v656 = vpop.f32.mrb[0].mxu0
      %v657 = vadd.f32 %v261, %v656
      %v658 = vpop.f32.mrb[0].mxu0
      %v659 = vadd.f32 %v265, %v658
      %660 = vdwg.mxu0
      %661 = vmatprep.subr.bf16.mxu0 %v493
      %662 = vmatpush1.bf16.msra.mxu0 %v492
      %663 = vmatprep.subr.bf16.mxu0 %v501
      %664 = vmatpush1.bf16.msra.mxu0 %v500
      %665 = vmatprep.subr.bf16.mxu0 %v509
      %666 = vmatpush1.bf16.msra.mxu0 %v508
      %667 = vmatprep.subr.bf16.mxu0 %v517
      %668 = vmatpush1.bf16.msra.mxu0 %v516
      %669 = vmatprep.subr.bf16.mxu0 %v525
      %670 = vmatpush1.bf16.msra.mxu0 %v524
      %671 = vmatprep.subr.bf16.mxu0 %v533
      %672 = vmatpush1.bf16.msra.mxu0 %v532
      %673 = vmatprep.subr.bf16.mxu0 %v541
      %674 = vmatpush1.bf16.msra.mxu0 %v540
      %675 = vmatprep.subr.bf16.mxu0 %v549
      %676 = vmatpush1.bf16.msra.mxu0 %v548
      %677 = vmatprep.subr.bf16.mxu0 0
      %678 = vmatpush1.bf16.msra.mxu0 0
      %679 = vmatprep.subr.bf16.mxu0 0
      %680 = vmatpush1.bf16.msra.mxu0 0
      %681 = vmatprep.subr.bf16.mxu0 0
      %682 = vmatpush1.bf16.msra.mxu0 0
      %683 = vmatprep.subr.bf16.mxu0 0
      %684 = vmatpush1.bf16.msra.mxu0 0
      %685 = vmatprep.subr.bf16.mxu0 0
      %686 = vmatpush1.bf16.msra.mxu0 0
      %687 = vmatprep.subr.bf16.mxu0 0
      %688 = vmatpush1.bf16.msra.mxu0 0
      %689 = vmatprep.subr.bf16.mxu0 0
      %690 = vmatpush1.bf16.msra.mxu0 0
      %691 = vmatprep.subr.bf16.mxu0 0
      %692 = vmatpush1.bf16.msra.mxu0 0
      %693 = vmatprep.mubr.bf16.mxu0 0
      %694 = vmatmul.mubr.bf16.gmra.mrb[0].mxu0 %v190
      %v695 = vpop.f32.mrb[0].mxu0
      %v696 = vadd.f32 %v269, %v695
      %v697 = vpop.f32.mrb[0].mxu0
      %v698 = vadd.f32 %v273, %v697
      %v699 = vpop.f32.mrb[0].mxu0
      %v700 = vadd.f32 %v269, %v699
      %v701 = vpop.f32.mrb[0].mxu0
      %v702 = vadd.f32 %v273, %v701
      %703 = vdwg.mxu0
      %704 = vmatprep.subr.bf16.mxu0 %v495
      %705 = vmatpush1.bf16.msra.mxu0 %v494
      %706 = vmatprep.subr.bf16.mxu0 %v503
      %707 = vmatpush1.bf16.msra.mxu0 %v502
      %708 = vmatprep.subr.bf16.mxu0 %v511
      %709 = vmatpush1.bf16.msra.mxu0 %v510
      %710 = vmatprep.subr.bf16.mxu0 %v519
      %711 = vmatpush1.bf16.msra.mxu0 %v518
      %712 = vmatprep.subr.bf16.mxu0 %v527
      %713 = vmatpush1.bf16.msra.mxu0 %v526
      %714 = vmatprep.subr.bf16.mxu0 %v535
      %715 = vmatpush1.bf16.msra.mxu0 %v534
      %716 = vmatprep.subr.bf16.mxu0 %v543
      %717 = vmatpush1.bf16.msra.mxu0 %v542
      %718 = vmatprep.subr.bf16.mxu0 %v551
      %719 = vmatpush1.bf16.msra.mxu0 %v550
      %720 = vmatprep.subr.bf16.mxu0 0
      %721 = vmatpush1.bf16.msra.mxu0 0
      %722 = vmatprep.subr.bf16.mxu0 0
      %723 = vmatpush1.bf16.msra.mxu0 0
      %724 = vmatprep.subr.bf16.mxu0 0
      %725 = vmatpush1.bf16.msra.mxu0 0
      %726 = vmatprep.subr.bf16.mxu0 0
      %727 = vmatpush1.bf16.msra.mxu0 0
      %728 = vmatprep.subr.bf16.mxu0 0
      %729 = vmatpush1.bf16.msra.mxu0 0
      %730 = vmatprep.subr.bf16.mxu0 0
      %731 = vmatpush1.bf16.msra.mxu0 0
      %732 = vmatprep.subr.bf16.mxu0 0
      %733 = vmatpush1.bf16.msra.mxu0 0
      %734 = vmatprep.subr.bf16.mxu0 0
      %735 = vmatpush1.bf16.msra.mxu0 0
      %736 = vmatprep.mubr.bf16.mxu0 0
      %737 = vmatmul.mubr.bf16.gmra.mrb[0].mxu0 %v190
      %v738 = vpop.f32.mrb[0].mxu0
      %v739 = vadd.f32 %v277, %v738
      %v740 = vpop.f32.mrb[0].mxu0
      %v741 = vadd.f32 %v281, %v740
      %v742 = vpop.f32.mrb[0].mxu0
      %v743 = vadd.f32 %v277, %v742
      %v744 = vpop.f32.mrb[0].mxu0
      %v745 = vadd.f32 %v281, %v744
      %746 = vdwg.mxu0
      %747 = vmatprep.subr.bf16.mxu0 %v497
      %748 = vmatpush1.bf16.msra.mxu0 %v496
      %749 = vmatprep.subr.bf16.mxu0 %v505
      %750 = vmatpush1.bf16.msra.mxu0 %v504
      %751 = vmatprep.subr.bf16.mxu0 %v513
      %752 = vmatpush1.bf16.msra.mxu0 %v512
      %753 = vmatprep.subr.bf16.mxu0 %v521
      %754 = vmatpush1.bf16.msra.mxu0 %v520
      %755 = vmatprep.subr.bf16.mxu0 %v529
      %756 = vmatpush1.bf16.msra.mxu0 %v528
      %757 = vmatprep.subr.bf16.mxu0 %v537
      %758 = vmatpush1.bf16.msra.mxu0 %v536
      %759 = vmatprep.subr.bf16.mxu0 %v545
      %760 = vmatpush1.bf16.msra.mxu0 %v544
      %761 = vmatprep.subr.bf16.mxu0 %v553
      %762 = vmatpush1.bf16.msra.mxu0 %v552
      %763 = vmatprep.subr.bf16.mxu0 0
      %764 = vmatpush1.bf16.msra.mxu0 0
      %765 = vmatprep.subr.bf16.mxu0 0
      %766 = vmatpush1.bf16.msra.mxu0 0
      %767 = vmatprep.subr.bf16.mxu0 0
      %768 = vmatpush1.bf16.msra.mxu0 0
      %769 = vmatprep.subr.bf16.mxu0 0
      %770 = vmatpush1.bf16.msra.mxu0 0
      %771 = vmatprep.subr.bf16.mxu0 0
      %772 = vmatpush1.bf16.msra.mxu0 0
      %773 = vmatprep.subr.bf16.mxu0 0
      %774 = vmatpush1.bf16.msra.mxu0 0
      %775 = vmatprep.subr.bf16.mxu0 0
      %776 = vmatpush1.bf16.msra.mxu0 0
      %777 = vmatprep.subr.bf16.mxu0 0
      %778 = vmatpush1.bf16.msra.mxu0 0
      %779 = vmatprep.mubr.bf16.mxu0 0
      %780 = vmatmul.mubr.bf16.gmra.mrb[0].mxu0 %v190
      %v781 = vpop.f32.mrb[0].mxu0
      %v782 = vadd.f32 %v285, %v781
      %v783 = vpop.f32.mrb[0].mxu0
      %v784 = vadd.f32 %v289, %v783
      %v785 = vpop.f32.mrb[0].mxu0
      %v786 = vadd.f32 %v285, %v785
      %v787 = vpop.f32.mrb[0].mxu0
      %v788 = vadd.f32 %v289, %v787
      %789 = vdwg.mxu0
      %v790 = vxor.u32 %v739, 2147483648
      %v791 = vxor.u32 %v741, 2147483648
      %v792 = vxor.u32 %v782, 2147483648
      %v793 = vxor.u32 %v784, 2147483648
      %v794 = vxor.u32 %v743, 2147483648
      %v795 = vxor.u32 %v745, 2147483648
      %v796 = vxor.u32 %v786, 2147483648
      %v797 = vxor.u32 %v788, 2147483648
      %v798 = vmul.f32 %v790, 1.442695
      %v799 = vpow.pop %v798
      %v800 = vmul.f32 %v791, 1.442695
      %v801 = vpow.pop %v800
      %v802 = vmul.f32 %v792, 1.442695
      %v803 = vpow.pop %v802
      %v804 = vmul.f32 %v793, 1.442695
      %v805 = vpow.pop %v804
      %v806 = vmul.f32 %v794, 1.442695
      %v807 = vpow.pop %v806
      %v808 = vmul.f32 %v795, 1.442695
      %v809 = vpow.pop %v808
      %v810 = vmul.f32 %v796, 1.442695
      %v811 = vpow.pop %v810
      %v812 = vmul.f32 %v797, 1.442695
      %v813 = vpow.pop %v812
      %v814 = vadd.f32 %v799, 1.0
      %v815 = vadd.f32 %v801, 1.0
      %v816 = vadd.f32 %v803, 1.0
      %v817 = vadd.f32 %v805, 1.0
      %v818 = vadd.f32 %v807, 1.0
      %v819 = vadd.f32 %v809, 1.0
      %v820 = vadd.f32 %v811, 1.0
      %v821 = vadd.f32 %v813, 1.0
      %v822 = vrcp.pop %v814
      %v823 = vmul.f32 1.0, %v822
      %v824 = vrcp.pop %v815
      %v825 = vmul.f32 1.0, %v824
      %v826 = vrcp.pop %v816
      %v827 = vmul.f32 1.0, %v826
      %v828 = vrcp.pop %v817
      %v829 = vmul.f32 1.0, %v828
      %v830 = vrcp.pop %v818
      %v831 = vmul.f32 1.0, %v830
      %v832 = vrcp.pop %v819
      %v833 = vmul.f32 1.0, %v832
      %v834 = vrcp.pop %v820
      %v835 = vmul.f32 1.0, %v834
      %v836 = vrcp.pop %v821
      %v837 = vmul.f32 1.0, %v836
      %v838 = vmul.f32 %v653, %v823
      %v839 = vmul.f32 %v655, %v825
      %v840 = vmul.f32 %v696, %v827
      %v841 = vmul.f32 %v698, %v829
      %v842 = vmul.f32 %v657, %v831
      %v843 = vmul.f32 %v659, %v833
      %v844 = vmul.f32 %v700, %v835
      %v845 = vmul.f32 %v702, %v837
      %846 = vst [vmem:[%s170] sm:$0xff] %v838
      %847 = vst [vmem:[%s170 + $0x8] sm:$0xff] %v839
      %848 = vst [vmem:[%s170 + $0x10] sm:$0xff] %v840
      %849 = vst [vmem:[%s170 + $0x18] sm:$0xff] %v841
      %850 = vst [vmem:[%s170 + $0x20] sm:$0x7f] %v842
      %851 = vst [vmem:[%s170 + $0x28] sm:$0x7f] %v843
      %852 = vst [vmem:[%s170 + $0x30] sm:$0x7f] %v844
      %853 = vst [vmem:[%s170 + $0x38] sm:$0x7f] %v845
      %p854 = scmp.lt.s32.totalorder %s14, 1
      %s855 = scalar_select %p854, %s14, 1
      %s856 = smul.addr %s855, 8
      %s857 = smul.addr %s856, 8
      %s858 = scalar_lea.vmem %s3, %s857
      // Predicated region
      $region33: #{glu_upsample_block_forward.1} parent=31 // pred_check
        %p859 = pneg %p100
      $region34: #{glu_upsample_block_forward.1} parent=31 // pred_check_branch
        %861 = sbr.rel (%p859) target = $region36
      $region35: #{glu_upsample_block_forward.1} parent=31 // pred_region
        _
      $region36: #{glu_upsample_block_forward.1} parent=31 // pred_fallthru
        _
    $region32: #{glu_upsample_block_forward.1} parent=5 // pred_fallthru
      _
    %p862 = scmp.le.s32.totalorder 2, %s9
    // Predicated region
    $region37: #{glu_upsample_block_forward.1} parent=5 // pred_check
      %p863 = pneg %p862
    $region38: #{glu_upsample_block_forward.1} parent=5 // pred_check_branch
      %865 = sbr.rel (%p863) target = $region40
    $region39: #{glu_upsample_block_forward.1} parent=5 // pred_region
      %s866 = ssub.s32 %s9, 2
      // Predicated region
      $region41: #{glu_upsample_block_forward.1} parent=39 // pred_check
        %p867 = pneg %p106
      $region42: #{glu_upsample_block_forward.1} parent=39 // pred_check_branch
        %869 = sbr.rel (%p867) target = $region44
      $region43: #{glu_upsample_block_forward.1} parent=39 // pred_region
        %p870 = scmp.lt.s32.totalorder %s15, 1
        %s871 = scalar_select %p870, %s15, 1
        %s872 = smul.addr %s871, 8
        %s873 = smul.addr %s872, 8
        %s874 = scalar_lea.vmem %s3, %s873
      $region44: #{glu_upsample_block_forward.1} parent=39 // pred_fallthru
        _
    $region40: #{glu_upsample_block_forward.1} parent=5 // pred_fallthru
      _
  $region6: #{glu_upsample_block_forward.1} parent=0 // loop_footer
    %s13 = sadd.s32 1, %s9
  $region7: #{glu_upsample_block_forward.1} parent=0 // loop_footer_branch
    %8 = sbr.rel target = $region3
  $region8: #{glu_upsample_block_forward.1} parent=0 // loop_exit
    _

</llo_original>
